<compile_context>
chip_gen: v5e
topology: v5e:2x2
jax: 0.10.0
libtpu: 0.0.40
codegen_flags: <defaults>
</compile_context>

<pallas_src>
import functools

import numpy as np
import jax
import jax.numpy as jnp
from jax import lax
from jax.experimental import pallas as pl
from jax.experimental.pallas import tpu as pltpu


# ----------------------------- Pallas kernel ------------------------------- #

def _frnn_kernel(center_ref, pos_ref, out_ref, *, radius, n_neighbor, b_tile):
    """Fixed-radius NN grouping for `b_tile` batch elements per grid step.

    center_ref : (b_tile, S, C)  f32  gathered centroid coordinates
    pos_ref    : (b_tile, C, N)  f32  point coords, lane-dense (points on lanes)
    out_ref    : (b_tile, S, K)  i32  neighbour indices
    """
    K = n_neighbor
    _, S, _ = center_ref.shape
    _, _, N = pos_ref.shape
    r2 = jnp.float32(radius * radius)
    sentinel = jnp.int32(N)

    # Point index along lanes; shared by every batch element in the tile.
    j_row = lax.broadcasted_iota(jnp.int32, (S, N), 1)

    def process(b):
        center = center_ref[b]                                     # (S, C) f32
        pos_t = pos_ref[b]                                         # (C, N) f32

        # square_distance(center, pos) = |c|^2 + |p|^2 - 2 c.p   (f32, on MXU)
        cp = jnp.dot(center, pos_t, preferred_element_type=jnp.float32)  # (S,N)
        c_sq = jnp.sum(center * center, axis=-1, keepdims=True)          # (S,1)
        p_sq = jnp.sum(pos_t * pos_t, axis=0, keepdims=True)             # (1,N)
        valid = (c_sq + p_sq - 2.0 * cp) <= r2                           # (S,N)

        # torch: group_idx = {j if valid else N}; sort ascending; take first K.
        # K masked-min passes over a carried int32 candidate array: each pass
        # picks the smallest remaining valid index and knocks it out.
        cand = jnp.where(valid, j_row, sentinel)                   # (S, N) i32
        cols = []
        for k in range(K):                             # K small: static unroll
            idx_k = jnp.min(cand, axis=-1, keepdims=True)          # (S, 1)
            cols.append(idx_k)
            if k + 1 < K:
                cand = jnp.where(cand == idx_k, sentinel, cand)
        idx = jnp.concatenate(cols, axis=-1)                       # (S, K)

        # Replace "N" padding (fewer than K in-radius points) with the first
        # neighbour (torch semantics).
        idx = jnp.where(idx == sentinel, cols[0], idx)
        out_ref[b] = idx

    if b_tile <= 2:
        for b in range(b_tile):                        # static unroll, tiny bt
            process(b)
    else:
        @pl.loop(0, b_tile)                            # bounds live ranges
        def _(b):
            process(b)


# ------------------------- sizing / device helpers -------------------------- #

def _tpu_budget():
    """(vmem_capacity_bytes, tensorcore_count) with conservative fallbacks."""
    vmem_cap = 64 * 1024 * 1024        # smallest physical VMEM (v7x per-TC)
    cores = 1                          # v5e / v6e have a single TensorCore
    try:
        info = pltpu.get_tpu_info()
        vmem_cap = int(getattr(info, "vmem_capacity_bytes", vmem_cap))
        for name in ("num_cores", "core_count", "num_tensorcores",
                     "tensorcore_count"):
            val = getattr(info, name, None)
            if val:
                cores = int(val)
                break
    except Exception:
        pass
    return vmem_cap, cores


def _vmem_estimate(bt, C, N, S, K):
    """VMEM bytes for a (bt, ...) block: double-buffered I/O blocks plus the
    (S, N) selection-loop temporaries (x bt only while the batch loop is
    statically unrolled, i.e. bt <= 2; pl.loop keeps one element live)."""
    io = 4 * bt * (C * N + S * C + S * K) * 2
    live_b = bt if bt <= 2 else 1
    temps = 4 * S * N * 8 * live_b
    return io + temps


def _pick_b_tile(B, C, N, S, K, budget_bytes, cores):
    """Largest batch tile that (a) divides B, (b) keeps the grid evenly
    divisible across TensorCores when the part has >=2 of them, (c) fits the
    VMEM budget.  On single-TC parts (v5e/v6e) there is no >=2-step rule."""
    best = 1
    for t in range(1, B + 1):
        if B % t:
            continue
        steps = B // t
        if cores >= 2 and B >= cores and steps % cores != 0:
            continue
        if _vmem_estimate(t, C, N, S, K) > budget_bytes:
            continue
        best = t
    return best


# ------------------------------- wrapper ----------------------------------- #

def fixed_radius_near_neighbors(pos, centroids, radius, n_neighbor, b_tile=None):
    """Pallas implementation of FixedRadiusNearNeighbors.forward.

    pos       : (B, N, 3) float32
    centroids : (B, S)    int32
    returns   : (B, S, K) int32   (torch returns int64; int32 is sufficient)
    """
    B, N, C = pos.shape
    S = centroids.shape[1]
    K = int(n_neighbor)

    pos32 = pos.astype(jnp.float32)
    # Lane-dense kernel layout: points along lanes, coords along sublanes.
    pos_t = jnp.transpose(pos32, (0, 2, 1))                          # (B, C, N)
    # index_points(pos, centroids): tiny (B, S, C) gather, left to XLA glue.
    center_pos = jnp.take_along_axis(
        pos32, centroids[:, :, None].astype(jnp.int32), axis=1)      # (B, S, C)

    vmem_cap, cores = _tpu_budget()
    budget = min(int(0.65 * vmem_cap), 80 * 1024 * 1024)
    bt = b_tile if b_tile is not None else _pick_b_tile(B, C, N, S, K,
                                                        budget, cores)
    assert B % bt == 0, "b_tile must divide the batch size"

    vmem_limit = int(min(int(0.85 * vmem_cap),
                         max(16 * 1024 * 1024,
                             2 * _vmem_estimate(bt, C, N, S, K))))

    kernel = functools.partial(_frnn_kernel, radius=float(radius),
                               n_neighbor=K, b_tile=bt)

    return pl.pallas_call(
        kernel,
        out_shape=jax.ShapeDtypeStruct((B, S, K), jnp.int32),
        grid_spec=pltpu.PrefetchScalarGridSpec(
            num_scalar_prefetch=0,
            grid=(B // bt,),
            in_specs=[
                pl.BlockSpec((bt, S, C), lambda g: (g, 0, 0)),
                pl.BlockSpec((bt, C, N), lambda g: (g, 0, 0)),
            ],
            out_specs=pl.BlockSpec((bt, S, K), lambda g: (g, 0, 0)),
        ),
        compiler_params=pltpu.CompilerParams(
            dimension_semantics=("parallel",),
            vmem_limit_bytes=vmem_limit),
    )(center_pos, pos_t)


# ----------------------- FixedRadiusNNGraph forward ------------------------ #

def fixed_radius_nn_graph(pos, centroids, radius, n_neighbor, feat=None,
                          b_tile=None):
    """Reproduces FixedRadiusNNGraph.forward.

    Heavy compute (distances / radius grouping) is the Pallas kernel above;
    graph assembly (np.unique re-indexing) is host-side numpy, as in PyTorch.
    """
    group_idx = fixed_radius_near_neighbors(pos, centroids, radius, n_neighbor,
                                            b_tile=b_tile)
    group_idx = jax.block_until_ready(group_idx)

    B, N, _ = pos.shape
    pos_np = np.asarray(pos)
    cent_np = np.asarray(centroids)
    gi_np = np.asarray(group_idx)
    feat_np = np.asarray(feat) if feat is not None else None

    glist = []
    for i in range(B):
        center = np.zeros(N, dtype=np.float32)
        center[cent_np[i]] = 1.0
        src = gi_np[i].reshape(-1)
        dst = np.repeat(cent_np[i].reshape(-1, 1), n_neighbor, axis=1).reshape(-1)
        unified = np.concatenate([src, dst])
        uniq, _, inv_idx = np.unique(unified, return_index=True,
                                     return_inverse=True)
        src_idx = inv_idx[: src.shape[0]]
        dst_idx = inv_idx[src.shape[0]:]
        g = {
            "edges": (src_idx, dst_idx),
            "pos": pos_np[i][uniq],
            "center": center[uniq],
        }
        if feat_np is not None:
            g["feat"] = feat_np[i][uniq]
        glist.append(g)
    # TODO(synk): dgl.DGLGraph / dgl.batch / g.update_all + PointNetConv have
    # no Pallas or JAX equivalent (dynamic graph objects); per-graph dicts are
    # returned instead.
    return glist, group_idx


# ------------------------------ reference ----------------------------------- #

def _frnn_reference(pos, centroids, radius, n_neighbor):
    """Pure-numpy port of the torch reference (square_distance + sort/take-K)."""
    pos = np.asarray(pos, dtype=np.float32)
    cent = np.asarray(centroids)
    B, N, _ = pos.shape
    S = cent.shape[1]
    K = n_neighbor
    out = np.zeros((B, S, K), dtype=np.int32)
    for b in range(B):
        c = pos[b][cent[b]]                                            # (S, 3)
        d2 = ((c ** 2).sum(-1, keepdims=True)
              + (pos[b] ** 2).sum(-1)[None, :]
              - 2.0 * (c @ pos[b].T))                                  # (S, N)
        gi = np.tile(np.arange(N, dtype=np.int64)[None, :], (S, 1))
        gi[d2 > radius * radius] = N
        gi = np.sort(gi, axis=-1)[:, :K]
        first = np.repeat(gi[:, :1], K, axis=1)
        gi = np.where(gi == N, first, gi)
        out[b] = gi.astype(np.int32)
    return out


# --------------------------------- main ------------------------------------ #

if __name__ == "__main__":
    B, N, S, K, C = 4, 128, 8, 16, 4
    radius = 0.35

    key = jax.random.PRNGKey(0)
    k_pos, k_cent, k_feat = jax.random.split(key, 3)

    pos = jax.random.uniform(k_pos, (B, N, 3), dtype=jnp.float32)
    # deterministic centroids: S distinct point indices per batch element
    centroids = jnp.stack(
        [jax.random.permutation(jax.random.fold_in(k_cent, b), N)[:S]
         for b in range(B)], axis=0).astype(jnp.int32)
    feat = jax.random.normal(k_feat, (B, N, C), dtype=jnp.float32)

    graphs, group_idx = fixed_radius_nn_graph(pos, centroids, radius, K, feat=feat)
    group_idx = jax.block_until_ready(group_idx)

    assert group_idx.shape == (B, S, K)
    assert group_idx.dtype == jnp.int32
    assert len(graphs) == B

    gi = np.asarray(group_idx)
    assert gi.min() >= 0 and gi.max() < N

    # sanity: every selected neighbour lies within `radius` of its centroid
    pos64 = np.asarray(pos, dtype=np.float64)
    cent = np.asarray(centroids)
    for b in range(B):
        ctr = pos64[b][cent[b]]                       # (S, 3)
        nbr = pos64[b][gi[b]]                         # (S, K, 3)
        d2 = ((nbr - ctr[:, None, :]) ** 2).sum(-1)
        assert float(d2.max()) <= radius * radius + 1e-3

    # matches the torch algorithm (tolerate rare radius-boundary flips from
    # MXU-vs-numpy f32 rounding)
    ref = _frnn_reference(pos, centroids, radius, K)
    match = float((gi == ref).mean())
    assert match >= 0.99, f"reference mismatch fraction {1.0 - match:.4f}"

    print("KERNEL_OK")
</pallas_src>

<mosaic_0001>
module attributes {stable_mosaic.version = 11 : i64} {
  func.func @_frnn_kernel(%arg0: i32, %arg1: memref<4x8x3xf32, #tpu.memory_space<vmem>>, %arg2: memref<4x3x128xf32, #tpu.memory_space<vmem>>, %arg3: memref<4x8x16xi32, #tpu.memory_space<vmem>>) attributes {dimension_semantics = [#tpu.dimension_semantics<parallel>], iteration_bounds = array<i64: 1>, scalar_prefetch = 0 : i64, scratch_operands = 0 : i64, tpu.core_type = #tpu.core_type<tc>, window_params = [{transform_indices = @transform_0, window_bounds = array<i64: 4, 8, 3>}, {transform_indices = @transform_1, window_bounds = array<i64: 4, 3, 128>}, {transform_indices = @transform_2, window_bounds = array<i64: 4, 8, 16>}]} {
    %0 = tpu.iota {dimensions = array<i32: 1>} : vector<8x128xi32>
    %cst = arith.constant 1.225000e-01 : f32
    %c128_i32 = arith.constant 128 : i32
    %c0_i32 = arith.constant 0 : i32
    %c4_i32 = arith.constant 4 : i32
    %1 = arith.addi %c0_i32, %c4_i32 : i32
    %c1_i32 = arith.constant 1 : i32
    scf.for %arg4 = %c0_i32 to %1 step %c1_i32  : i32 {
      %c1_i32_1 = arith.constant 1 : i32
      %2 = arith.muli %arg4, %c1_i32_1 : i32
      %c0_i32_2 = arith.constant 0 : i32
      %3 = arith.addi %c0_i32_2, %2 : i32
      %4 = arith.index_cast %3 : i32 to index
      %c0 = arith.constant 0 : index
      %c0_3 = arith.constant 0 : index
      %5 = vector.load %arg1[%4, %c0, %c0_3] : memref<4x8x3xf32, #tpu.memory_space<vmem>>, vector<1x8x3xf32>
      %6 = vector.shape_cast %5 : vector<1x8x3xf32> to vector<8x3xf32>
      %7 = arith.index_cast %3 : i32 to index
      %c0_4 = arith.constant 0 : index
      %c0_5 = arith.constant 0 : index
      %8 = vector.load %arg2[%7, %c0_4, %c0_5] : memref<4x3x128xf32, #tpu.memory_space<vmem>>, vector<1x3x128xf32>
      %9 = vector.shape_cast %8 : vector<1x3x128xf32> to vector<3x128xf32>
      %cst_6 = arith.constant dense<0.000000e+00> : vector<8x128xf32>
      %10 = tpu.matmul %6, %9, %cst_6 {dimension_numbers = #tpu.dot_dimension_numbers<[1], [0], [0], [1], [0, 0, 1, 1], [], []>} : vector<8x3xf32>, vector<3x128xf32>, vector<8x128xf32> -> vector<8x128xf32>
      %11 = arith.mulf %6, %6 : vector<8x3xf32>
      %cst_7 = arith.constant dense<0.000000e+00> : vector<8xf32>
      %12 = vector.multi_reduction <add>, %11, %cst_7 [1] : vector<8x3xf32> to vector<8xf32>
      %13 = vector.shape_cast %12 : vector<8xf32> to vector<8x1xf32>
      %14 = arith.mulf %9, %9 : vector<3x128xf32>
      %cst_8 = arith.constant dense<0.000000e+00> : vector<128xf32>
      %15 = vector.multi_reduction <add>, %14, %cst_8 [0] : vector<3x128xf32> to vector<128xf32>
      %16 = vector.shape_cast %15 : vector<128xf32> to vector<1x128xf32>
      %17 = vector.broadcast %13 : vector<8x1xf32> to vector<8x128xf32>
      %18 = vector.broadcast %16 : vector<1x128xf32> to vector<8x128xf32>
      %19 = arith.addf %17, %18 : vector<8x128xf32>
      %cst_9 = arith.constant 2.000000e+00 : f32
      %20 = vector.broadcast %cst_9 : f32 to vector<8x128xf32>
      %21 = arith.mulf %20, %10 : vector<8x128xf32>
      %22 = arith.subf %19, %21 : vector<8x128xf32>
      %23 = vector.broadcast %cst : f32 to vector<8x128xf32>
      %24 = arith.cmpf ole, %22, %23 : vector<8x128xf32>
      %25 = vector.broadcast %c128_i32 : i32 to vector<8x128xi32>
      %26 = arith.select %24, %0, %25 : vector<8x128xi1>, vector<8x128xi32>
      %cst_10 = arith.constant dense<2147483647> : vector<8xi32>
      %27 = vector.multi_reduction <minsi>, %26, %cst_10 [1] : vector<8x128xi32> to vector<8xi32>
      %28 = vector.shape_cast %27 : vector<8xi32> to vector<8x1xi32>
      %29 = vector.broadcast %28 : vector<8x1xi32> to vector<8x128xi32>
      %30 = arith.cmpi eq, %26, %29 : vector<8x128xi32>
      %31 = vector.broadcast %c128_i32 : i32 to vector<8x128xi32>
      %32 = arith.select %30, %31, %26 : vector<8x128xi1>, vector<8x128xi32>
      %cst_11 = arith.constant dense<2147483647> : vector<8xi32>
      %33 = vector.multi_reduction <minsi>, %32, %cst_11 [1] : vector<8x128xi32> to vector<8xi32>
      %34 = vector.shape_cast %33 : vector<8xi32> to vector<8x1xi32>
      %35 = vector.broadcast %34 : vector<8x1xi32> to vector<8x128xi32>
      %36 = arith.cmpi eq, %32, %35 : vector<8x128xi32>
      %37 = vector.broadcast %c128_i32 : i32 to vector<8x128xi32>
      %38 = arith.select %36, %37, %32 : vector<8x128xi1>, vector<8x128xi32>
      %cst_12 = arith.constant dense<2147483647> : vector<8xi32>
      %39 = vector.multi_reduction <minsi>, %38, %cst_12 [1] : vector<8x128xi32> to vector<8xi32>
      %40 = vector.shape_cast %39 : vector<8xi32> to vector<8x1xi32>
      %41 = vector.broadcast %40 : vector<8x1xi32> to vector<8x128xi32>
      %42 = arith.cmpi eq, %38, %41 : vector<8x128xi32>
      %43 = vector.broadcast %c128_i32 : i32 to vector<8x128xi32>
      %44 = arith.select %42, %43, %38 : vector<8x128xi1>, vector<8x128xi32>
      %cst_13 = arith.constant dense<2147483647> : vector<8xi32>
      %45 = vector.multi_reduction <minsi>, %44, %cst_13 [1] : vector<8x128xi32> to vector<8xi32>
      %46 = vector.shape_cast %45 : vector<8xi32> to vector<8x1xi32>
      %47 = vector.broadcast %46 : vector<8x1xi32> to vector<8x128xi32>
      %48 = arith.cmpi eq, %44, %47 : vector<8x128xi32>
      %49 = vector.broadcast %c128_i32 : i32 to vector<8x128xi32>
      %50 = arith.select %48, %49, %44 : vector<8x128xi1>, vector<8x128xi32>
      %cst_14 = arith.constant dense<2147483647> : vector<8xi32>
      %51 = vector.multi_reduction <minsi>, %50, %cst_14 [1] : vector<8x128xi32> to vector<8xi32>
      %52 = vector.shape_cast %51 : vector<8xi32> to vector<8x1xi32>
      %53 = vector.broadcast %52 : vector<8x1xi32> to vector<8x128xi32>
      %54 = arith.cmpi eq, %50, %53 : vector<8x128xi32>
      %55 = vector.broadcast %c128_i32 : i32 to vector<8x128xi32>
      %56 = arith.select %54, %55, %50 : vector<8x128xi1>, vector<8x128xi32>
      %cst_15 = arith.constant dense<2147483647> : vector<8xi32>
      %57 = vector.multi_reduction <minsi>, %56, %cst_15 [1] : vector<8x128xi32> to vector<8xi32>
      %58 = vector.shape_cast %57 : vector<8xi32> to vector<8x1xi32>
      %59 = vector.broadcast %58 : vector<8x1xi32> to vector<8x128xi32>
      %60 = arith.cmpi eq, %56, %59 : vector<8x128xi32>
      %61 = vector.broadcast %c128_i32 : i32 to vector<8x128xi32>
      %62 = arith.select %60, %61, %56 : vector<8x128xi1>, vector<8x128xi32>
      %cst_16 = arith.constant dense<2147483647> : vector<8xi32>
      %63 = vector.multi_reduction <minsi>, %62, %cst_16 [1] : vector<8x128xi32> to vector<8xi32>
      %64 = vector.shape_cast %63 : vector<8xi32> to vector<8x1xi32>
      %65 = vector.broadcast %64 : vector<8x1xi32> to vector<8x128xi32>
      %66 = arith.cmpi eq, %62, %65 : vector<8x128xi32>
      %67 = vector.broadcast %c128_i32 : i32 to vector<8x128xi32>
      %68 = arith.select %66, %67, %62 : vector<8x128xi1>, vector<8x128xi32>
      %cst_17 = arith.constant dense<2147483647> : vector<8xi32>
      %69 = vector.multi_reduction <minsi>, %68, %cst_17 [1] : vector<8x128xi32> to vector<8xi32>
      %70 = vector.shape_cast %69 : vector<8xi32> to vector<8x1xi32>
      %71 = vector.broadcast %70 : vector<8x1xi32> to vector<8x128xi32>
      %72 = arith.cmpi eq, %68, %71 : vector<8x128xi32>
      %73 = vector.broadcast %c128_i32 : i32 to vector<8x128xi32>
      %74 = arith.select %72, %73, %68 : vector<8x128xi1>, vector<8x128xi32>
      %cst_18 = arith.constant dense<2147483647> : vector<8xi32>
      %75 = vector.multi_reduction <minsi>, %74, %cst_18 [1] : vector<8x128xi32> to vector<8xi32>
      %76 = vector.shape_cast %75 : vector<8xi32> to vector<8x1xi32>
      %77 = vector.broadcast %76 : vector<8x1xi32> to vector<8x128xi32>
      %78 = arith.cmpi eq, %74, %77 : vector<8x128xi32>
      %79 = vector.broadcast %c128_i32 : i32 to vector<8x128xi32>
      %80 = arith.select %78, %79, %74 : vector<8x128xi1>, vector<8x128xi32>
      %cst_19 = arith.constant dense<2147483647> : vector<8xi32>
      %81 = vector.multi_reduction <minsi>, %80, %cst_19 [1] : vector<8x128xi32> to vector<8xi32>
      %82 = vector.shape_cast %81 : vector<8xi32> to vector<8x1xi32>
      %83 = vector.broadcast %82 : vector<8x1xi32> to vector<8x128xi32>
      %84 = arith.cmpi eq, %80, %83 : vector<8x128xi32>
      %85 = vector.broadcast %c128_i32 : i32 to vector<8x128xi32>
      %86 = arith.select %84, %85, %80 : vector<8x128xi1>, vector<8x128xi32>
      %cst_20 = arith.constant dense<2147483647> : vector<8xi32>
      %87 = vector.multi_reduction <minsi>, %86, %cst_20 [1] : vector<8x128xi32> to vector<8xi32>
      %88 = vector.shape_cast %87 : vector<8xi32> to vector<8x1xi32>
      %89 = vector.broadcast %88 : vector<8x1xi32> to vector<8x128xi32>
      %90 = arith.cmpi eq, %86, %89 : vector<8x128xi32>
      %91 = vector.broadcast %c128_i32 : i32 to vector<8x128xi32>
      %92 = arith.select %90, %91, %86 : vector<8x128xi1>, vector<8x128xi32>
      %cst_21 = arith.constant dense<2147483647> : vector<8xi32>
      %93 = vector.multi_reduction <minsi>, %92, %cst_21 [1] : vector<8x128xi32> to vector<8xi32>
      %94 = vector.shape_cast %93 : vector<8xi32> to vector<8x1xi32>
      %95 = vector.broadcast %94 : vector<8x1xi32> to vector<8x128xi32>
      %96 = arith.cmpi eq, %92, %95 : vector<8x128xi32>
      %97 = vector.broadcast %c128_i32 : i32 to vector<8x128xi32>
      %98 = arith.select %96, %97, %92 : vector<8x128xi1>, vector<8x128xi32>
      %cst_22 = arith.constant dense<2147483647> : vector<8xi32>
      %99 = vector.multi_reduction <minsi>, %98, %cst_22 [1] : vector<8x128xi32> to vector<8xi32>
      %100 = vector.shape_cast %99 : vector<8xi32> to vector<8x1xi32>
      %101 = vector.broadcast %100 : vector<8x1xi32> to vector<8x128xi32>
      %102 = arith.cmpi eq, %98, %101 : vector<8x128xi32>
      %103 = vector.broadcast %c128_i32 : i32 to vector<8x128xi32>
      %104 = arith.select %102, %103, %98 : vector<8x128xi1>, vector<8x128xi32>
      %cst_23 = arith.constant dense<2147483647> : vector<8xi32>
      %105 = vector.multi_reduction <minsi>, %104, %cst_23 [1] : vector<8x128xi32> to vector<8xi32>
      %106 = vector.shape_cast %105 : vector<8xi32> to vector<8x1xi32>
      %107 = vector.broadcast %106 : vector<8x1xi32> to vector<8x128xi32>
      %108 = arith.cmpi eq, %104, %107 : vector<8x128xi32>
      %109 = vector.broadcast %c128_i32 : i32 to vector<8x128xi32>
      %110 = arith.select %108, %109, %104 : vector<8x128xi1>, vector<8x128xi32>
      %cst_24 = arith.constant dense<2147483647> : vector<8xi32>
      %111 = vector.multi_reduction <minsi>, %110, %cst_24 [1] : vector<8x128xi32> to vector<8xi32>
      %112 = vector.shape_cast %111 : vector<8xi32> to vector<8x1xi32>
      %113 = vector.broadcast %112 : vector<8x1xi32> to vector<8x128xi32>
      %114 = arith.cmpi eq, %110, %113 : vector<8x128xi32>
      %115 = vector.broadcast %c128_i32 : i32 to vector<8x128xi32>
      %116 = arith.select %114, %115, %110 : vector<8x128xi1>, vector<8x128xi32>
      %cst_25 = arith.constant dense<2147483647> : vector<8xi32>
      %117 = vector.multi_reduction <minsi>, %116, %cst_25 [1] : vector<8x128xi32> to vector<8xi32>
      %118 = vector.shape_cast %117 : vector<8xi32> to vector<8x1xi32>
      %119 = tpu.concatenate %28, %34, %40, %46, %52, %58, %64, %70, %76, %82, %88, %94, %100, %106, %112, %118 in 1 : vector<8x1xi32>, vector<8x1xi32>, vector<8x1xi32>, vector<8x1xi32>, vector<8x1xi32>, vector<8x1xi32>, vector<8x1xi32>, vector<8x1xi32>, vector<8x1xi32>, vector<8x1xi32>, vector<8x1xi32>, vector<8x1xi32>, vector<8x1xi32>, vector<8x1xi32>, vector<8x1xi32>, vector<8x1xi32> -> vector<8x16xi32>
      %120 = vector.broadcast %c128_i32 : i32 to vector<8x16xi32>
      %121 = arith.cmpi eq, %119, %120 : vector<8x16xi32>
      %122 = vector.shape_cast %28 : vector<8x1xi32> to vector<8x1xi32>
      %123 = vector.broadcast %122 : vector<8x1xi32> to vector<8x16xi32>
      %124 = arith.select %121, %123, %119 : vector<8x16xi1>, vector<8x16xi32>
      %125 = arith.index_cast %3 : i32 to index
      %c0_26 = arith.constant 0 : index
      %c0_27 = arith.constant 0 : index
      %126 = vector.load %arg3[%125, %c0_26, %c0_27] : memref<4x8x16xi32, #tpu.memory_space<vmem>>, vector<1x8x16xi32>
      %127 = vector.shape_cast %126 : vector<1x8x16xi32> to vector<8x16xi32>
      %128 = vector.shape_cast %124 : vector<8x16xi32> to vector<1x8x16xi32>
      tpu.vector_store %arg3[%125, %c0_26, %c0_27], %128 {strides = array<i32>} : memref<4x8x16xi32, #tpu.memory_space<vmem>>, vector<1x8x16xi32>,
    }
    %c4_i32_0 = arith.constant 4 : i32
    return
  }
  func.func @transform_0(%arg0: i32) -> (i32, i32, i32) {
    %c0_i32 = arith.constant 0 : i32
    %c0_i32_0 = arith.constant 0 : i32
    %c0_i32_1 = arith.constant 0 : i32
    return %arg0, %c0_i32, %c0_i32_0 : i32, i32, i32
  }
  func.func @transform_1(%arg0: i32) -> (i32, i32, i32) {
    %c0_i32 = arith.constant 0 : i32
    %c0_i32_0 = arith.constant 0 : i32
    %c0_i32_1 = arith.constant 0 : i32
    return %arg0, %c0_i32, %c0_i32_0 : i32, i32, i32
  }
  func.func @transform_2(%arg0: i32) -> (i32, i32, i32) {
    %c0_i32 = arith.constant 0 : i32
    %c0_i32_0 = arith.constant 0 : i32
    %c0_i32_1 = arith.constant 0 : i32
    return %arg0, %c0_i32, %c0_i32_0 : i32, i32, i32
  }
}

</mosaic_0001>

<llo_original>
// kernel: tpu_custom_call.1
$region0: #{tpu_custom_call.1}
  #allocation0 [shape = 'u32[]', space=smem, size = 0x4, offset = 0x4, fixed_abs, tag = 'smem constant byte address 0x4 - core index']
  #allocation1 [shape = 'u32[72,128]{1,0:T(1,128)}', space=vmem, size = 0x9000, scoped, tag = 'internal scratch']
  %s0 = inlined_call_operand.vmem [shape: f32[4,8,3], index: 0, kind: input, shape index: {}]
  %s1 = inlined_call_operand.vmem [shape: f32[4,3,128], index: 1, kind: input, shape index: {}]
  %s2 = inlined_call_operand.hbm [shape: s32[4,8,16], index: 2, kind: output, shape index: {}]
  %s3 = sld [smem:[#allocation0]]
  $region25: #{tpu_custom_call.1} parent=0
    _
  %s5 = ssub.s32 1, %s3
  %s6 = scalar_select 0, %s5, %s3
  $region1: #{tpu_custom_call.1} parent=0
    #allocation2 [shape = 'u8[16384]{0}', space=vmem, size = 0x4000, scoped, tag = 'output window, operand 0, single buffered']
    #allocation3 [shape = 's32[1]{0}', space=sflag, size = 0x4, scoped, tag = 'scoped memory for tpu_custom_call.1']
    %7 = vsyncpa [#allocation3], 0
    // Predicated region
    $region2: #{tpu_custom_call.1} parent=1 // pred_check
      _
    $region3: #{tpu_custom_call.1} parent=1 // pred_check_branch
      %9 = sbr.rel (0) target = $region5
    $region4: #{tpu_custom_call.1} parent=1 // pred_region
      _
    $region5: #{tpu_custom_call.1} parent=1 // pred_fallthru
      _
    // Predicated region
    $region6: #{tpu_custom_call.1} parent=1 // pred_check
      _
    $region7: #{tpu_custom_call.1} parent=1 // pred_check_branch
      %11 = sbr.rel (0) target = $region9
    $region8: #{tpu_custom_call.1} parent=1 // pred_region
      _
    $region9: #{tpu_custom_call.1} parent=1 // pred_fallthru
      _
    %v12 = vlaneseq
    %v13 = vand.u32 %v12, 127
    loop: start=0, step=1, limit=4
    $region10: #{tpu_custom_call.1} parent=1 // loop_pre_header
      _
    $region11: #{tpu_custom_call.1} parent=1 // loop_header
      %s15 = sphi 0, %s19
      %p16 = scmp.ge.s32.totalorder %s15, 4
    $region12: #{tpu_custom_call.1} parent=1 // loop_header_branch
      %18 = sbr.rel (%p16) target = $region16
    $region13: #{tpu_custom_call.1} parent=1 // loop_body
      %s20 = smul.u32 %s15, 8
      %s21 = scalar_lea.vmem %s0, %s20
      %v22 = vld [vmem:[%s21] sm:$0xff]
      %s23 = smul.u32 %s15, 4
      %s24 = scalar_lea.vmem %s1, %s23
      %v25 = vld [vmem:[%s24] sm:$0x7]
      %vm26 = vcmask 23552
      %v28 = vsel %vm26, %v22, 0
      %vm30 = vcmask 1042432
      %v32 = vsel %vm30, %v25, 0
      %34 = vmatpush.msra.mxu0 0.0
      %35 = vmatpush.msra.mxu0 0.0
      %36 = vmatpush.msra.mxu0 0.0
      %37 = vmatpush.msra.mxu0 0.0
      %38 = vmatpush.msra.mxu0 0.0
      %39 = vmatpush.msra.mxu0 0.0
      %40 = vmatpush.msra.mxu0 0.0
      %41 = vmatpush.msra.mxu0 0.0
      %42 = vmatpush.msra.mxu0 0.0
      %43 = vmatpush.msra.mxu0 0.0
      %44 = vmatpush.msra.mxu0 0.0
      %45 = vmatpush.msra.mxu0 0.0
      %46 = vmatpush.msra.mxu0 0.0
      %47 = vmatpush.msra.mxu0 0.0
      %48 = vmatpush.msra.mxu0 0.0
      %49 = vmatpush.msra.mxu0 %v32
      %50 = vmatmul.f32.gmra.mxu0 %v28
      %v51 = vpop.f32.mrf.mxu0
      %v52 = vadd.f32 0.0, %v51
      %53 = vdwg.mxu0
      %v54 = vmul.f32 %v22, %v22
      %v55 = vsel %vm26, %v54, 0.0
      %56 = vadd.xlane.f32.xlu0 %v55
      %v57 = vpop.xlane.xlu0 %56
      %v58 = vmul.f32 %v25, %v25
      %v59 = vsel %vm30, %v58, 0.0
      %v60 = vrot.slane %v59, 4
      %v61 = vadd.f32 %v59, %v60
      %v62 = vrot.slane %v61, 2
      %v63 = vadd.f32 %v61, %v62
      %v64 = vrot.slane %v63, 1
      %v65 = vadd.f32 %v63, %v64
      %v66 = vadd.f32 %v57, %v65
      %v67 = vmul.f32 %v52, 2.0
      %v68 = vsub.f32 %v66, %v67
      %vm69 = vcmp.le.f32.partialorder %v68, 0.1225
      %v70 = vsel %vm69, %v13, 128
      %v71 = vand.u32 %v70, 65535
      %v72 = vshra.s32 %v70, 16
      %v73 = vcvt.s32.f32 %v71
      %v74 = vcvt.s32.f32 %v72
      %75 = vmin.xlane.f32.xlu0 %v74
      %v76 = vpop.xlane.xlu0 %75
      %vm77 = vcmp.eq.f32.partialorder %v74, %v76
      %v78 = vsel %vm77, %v73, inf
      %79 = vmin.xlane.f32.xlu0 %v78
      %v80 = vpop.xlane.xlu0 %79
      %v81 = vcvt.f32.s32 %v80
      %v82 = vcvt.f32.s32 %v76
      %v83 = vshll.u32 %v82, 16
      %v84 = vadd.s32 %v83, %v81
      %vm85 = vcmp.eq.s32.totalorder %v70, %v84
      %v86 = vsel %vm85, 128, %v70
      %v87 = vand.u32 %v86, 65535
      %v88 = vshra.s32 %v86, 16
      %v89 = vcvt.s32.f32 %v87
      %v90 = vcvt.s32.f32 %v88
      %91 = vmin.xlane.f32.xlu0 %v90
      %v92 = vpop.xlane.xlu0 %91
      %vm93 = vcmp.eq.f32.partialorder %v90, %v92
      %v94 = vsel %vm93, %v89, inf
      %95 = vmin.xlane.f32.xlu0 %v94
      %v96 = vpop.xlane.xlu0 %95
      %v97 = vcvt.f32.s32 %v96
      %v98 = vcvt.f32.s32 %v92
      %v99 = vshll.u32 %v98, 16
      %v100 = vadd.s32 %v99, %v97
      %vm101 = vcmp.eq.s32.totalorder %v86, %v100
      %v102 = vsel %vm101, 128, %v86
      %v103 = vand.u32 %v102, 65535
      %v104 = vshra.s32 %v102, 16
      %v105 = vcvt.s32.f32 %v103
      %v106 = vcvt.s32.f32 %v104
      %107 = vmin.xlane.f32.xlu0 %v106
      %v108 = vpop.xlane.xlu0 %107
      %vm109 = vcmp.eq.f32.partialorder %v106, %v108
      %v110 = vsel %vm109, %v105, inf
      %111 = vmin.xlane.f32.xlu0 %v110
      %v112 = vpop.xlane.xlu0 %111
      %v113 = vcvt.f32.s32 %v112
      %v114 = vcvt.f32.s32 %v108
      %v115 = vshll.u32 %v114, 16
      %v116 = vadd.s32 %v115, %v113
      %vm117 = vcmp.eq.s32.totalorder %v102, %v116
      %v118 = vsel %vm117, 128, %v102
      %v119 = vand.u32 %v118, 65535
      %v120 = vshra.s32 %v118, 16
      %v121 = vcvt.s32.f32 %v119
      %v122 = vcvt.s32.f32 %v120
      %123 = vmin.xlane.f32.xlu0 %v122
      %v124 = vpop.xlane.xlu0 %123
      %vm125 = vcmp.eq.f32.partialorder %v122, %v124
      %v126 = vsel %vm125, %v121, inf
      %127 = vmin.xlane.f32.xlu0 %v126
      %v128 = vpop.xlane.xlu0 %127
      %v129 = vcvt.f32.s32 %v128
      %v130 = vcvt.f32.s32 %v124
      %v131 = vshll.u32 %v130, 16
      %v132 = vadd.s32 %v131, %v129
      %vm133 = vcmp.eq.s32.totalorder %v118, %v132
      %v134 = vsel %vm133, 128, %v118
      %v135 = vand.u32 %v134, 65535
      %v136 = vshra.s32 %v134, 16
      %v137 = vcvt.s32.f32 %v135
      %v138 = vcvt.s32.f32 %v136
      %139 = vmin.xlane.f32.xlu0 %v138
      %v140 = vpop.xlane.xlu0 %139
      %vm141 = vcmp.eq.f32.partialorder %v138, %v140
      %v142 = vsel %vm141, %v137, inf
      %143 = vmin.xlane.f32.xlu0 %v142
      %v144 = vpop.xlane.xlu0 %143
      %v145 = vcvt.f32.s32 %v144
      %v146 = vcvt.f32.s32 %v140
      %v147 = vshll.u32 %v146, 16
      %v148 = vadd.s32 %v147, %v145
      %vm149 = vcmp.eq.s32.totalorder %v134, %v148
      %v150 = vsel %vm149, 128, %v134
      %v151 = vand.u32 %v150, 65535
      %v152 = vshra.s32 %v150, 16
      %v153 = vcvt.s32.f32 %v151
      %v154 = vcvt.s32.f32 %v152
      %155 = vmin.xlane.f32.xlu0 %v154
      %v156 = vpop.xlane.xlu0 %155
      %vm157 = vcmp.eq.f32.partialorder %v154, %v156
      %v158 = vsel %vm157, %v153, inf
      %159 = vmin.xlane.f32.xlu0 %v158
      %v160 = vpop.xlane.xlu0 %159
      %v161 = vcvt.f32.s32 %v160
      %v162 = vcvt.f32.s32 %v156
      %v163 = vshll.u32 %v162, 16
      %v164 = vadd.s32 %v163, %v161
      %vm165 = vcmp.eq.s32.totalorder %v150, %v164
      %v166 = vsel %vm165, 128, %v150
      %v167 = vand.u32 %v166, 65535
      %v168 = vshra.s32 %v166, 16
      %v169 = vcvt.s32.f32 %v167
      %v170 = vcvt.s32.f32 %v168
      %171 = vmin.xlane.f32.xlu0 %v170
      %v172 = vpop.xlane.xlu0 %171
      %vm173 = vcmp.eq.f32.partialorder %v170, %v172
      %v174 = vsel %vm173, %v169, inf
      %175 = vmin.xlane.f32.xlu0 %v174
      %v176 = vpop.xlane.xlu0 %175
      %v177 = vcvt.f32.s32 %v176
      %v178 = vcvt.f32.s32 %v172
      %v179 = vshll.u32 %v178, 16
      %v180 = vadd.s32 %v179, %v177
      %vm181 = vcmp.eq.s32.totalorder %v166, %v180
      %v182 = vsel %vm181, 128, %v166
      %v183 = vand.u32 %v182, 65535
      %v184 = vshra.s32 %v182, 16
      %v185 = vcvt.s32.f32 %v183
      %v186 = vcvt.s32.f32 %v184
      %187 = vmin.xlane.f32.xlu0 %v186
      %v188 = vpop.xlane.xlu0 %187
      %vm189 = vcmp.eq.f32.partialorder %v186, %v188
      %v190 = vsel %vm189, %v185, inf
      %191 = vmin.xlane.f32.xlu0 %v190
      %v192 = vpop.xlane.xlu0 %191
      %v193 = vcvt.f32.s32 %v192
      %v194 = vcvt.f32.s32 %v188
      %v195 = vshll.u32 %v194, 16
      %v196 = vadd.s32 %v195, %v193
      %vm197 = vcmp.eq.s32.totalorder %v182, %v196
      %v198 = vsel %vm197, 128, %v182
      %v199 = vand.u32 %v198, 65535
      %v200 = vshra.s32 %v198, 16
      %v201 = vcvt.s32.f32 %v199
      %v202 = vcvt.s32.f32 %v200
      %203 = vmin.xlane.f32.xlu0 %v202
      %v204 = vpop.xlane.xlu0 %203
      %vm205 = vcmp.eq.f32.partialorder %v202, %v204
      %v206 = vsel %vm205, %v201, inf
      %207 = vmin.xlane.f32.xlu0 %v206
      %v208 = vpop.xlane.xlu0 %207
      %v209 = vcvt.f32.s32 %v208
      %v210 = vcvt.f32.s32 %v204
      %v211 = vshll.u32 %v210, 16
      %v212 = vadd.s32 %v211, %v209
      %vm213 = vcmp.eq.s32.totalorder %v198, %v212
      %v214 = vsel %vm213, 128, %v198
      %v215 = vand.u32 %v214, 65535
      %v216 = vshra.s32 %v214, 16
      %v217 = vcvt.s32.f32 %v215
      %v218 = vcvt.s32.f32 %v216
      %219 = vmin.xlane.f32.xlu0 %v218
      %v220 = vpop.xlane.xlu0 %219
      %vm221 = vcmp.eq.f32.partialorder %v218, %v220
      %v222 = vsel %vm221, %v217, inf
      %223 = vmin.xlane.f32.xlu0 %v222
      %v224 = vpop.xlane.xlu0 %223
      %v225 = vcvt.f32.s32 %v224
      %v226 = vcvt.f32.s32 %v220
      %v227 = vshll.u32 %v226, 16
      %v228 = vadd.s32 %v227, %v225
      %vm229 = vcmp.eq.s32.totalorder %v214, %v228
      %v230 = vsel %vm229, 128, %v214
      %v231 = vand.u32 %v230, 65535
      %v232 = vshra.s32 %v230, 16
      %v233 = vcvt.s32.f32 %v231
      %v234 = vcvt.s32.f32 %v232
      %235 = vmin.xlane.f32.xlu0 %v234
      %v236 = vpop.xlane.xlu0 %235
      %vm237 = vcmp.eq.f32.partialorder %v234, %v236
      %v238 = vsel %vm237, %v233, inf
      %239 = vmin.xlane.f32.xlu0 %v238
      %v240 = vpop.xlane.xlu0 %239
      %v241 = vcvt.f32.s32 %v240
      %v242 = vcvt.f32.s32 %v236
      %v243 = vshll.u32 %v242, 16
      %v244 = vadd.s32 %v243, %v241
      %vm245 = vcmp.eq.s32.totalorder %v230, %v244
      %v246 = vsel %vm245, 128, %v230
      %v247 = vand.u32 %v246, 65535
      %v248 = vshra.s32 %v246, 16
      %v249 = vcvt.s32.f32 %v247
      %v250 = vcvt.s32.f32 %v248
      %251 = vmin.xlane.f32.xlu0 %v250
      %v252 = vpop.xlane.xlu0 %251
      %vm253 = vcmp.eq.f32.partialorder %v250, %v252
      %v254 = vsel %vm253, %v249, inf
      %255 = vmin.xlane.f32.xlu0 %v254
      %v256 = vpop.xlane.xlu0 %255
      %v257 = vcvt.f32.s32 %v256
      %v258 = vcvt.f32.s32 %v252
      %v259 = vshll.u32 %v258, 16
      %v260 = vadd.s32 %v259, %v257
      %vm261 = vcmp.eq.s32.totalorder %v246, %v260
      %v262 = vsel %vm261, 128, %v246
      %v263 = vand.u32 %v262, 65535
      %v264 = vshra.s32 %v262, 16
      %v265 = vcvt.s32.f32 %v263
      %v266 = vcvt.s32.f32 %v264
      %267 = vmin.xlane.f32.xlu0 %v266
      %v268 = vpop.xlane.xlu0 %267
      %vm269 = vcmp.eq.f32.partialorder %v266, %v268
      %v270 = vsel %vm269, %v265, inf
      %271 = vmin.xlane.f32.xlu0 %v270
      %v272 = vpop.xlane.xlu0 %271
      %v273 = vcvt.f32.s32 %v272
      %v274 = vcvt.f32.s32 %v268
      %v275 = vshll.u32 %v274, 16
      %v276 = vadd.s32 %v275, %v273
      %vm277 = vcmp.eq.s32.totalorder %v262, %v276
      %v278 = vsel %vm277, 128, %v262
      %v279 = vand.u32 %v278, 65535
      %v280 = vshra.s32 %v278, 16
      %v281 = vcvt.s32.f32 %v279
      %v282 = vcvt.s32.f32 %v280
      %283 = vmin.xlane.f32.xlu0 %v282
      %v284 = vpop.xlane.xlu0 %283
      %vm285 = vcmp.eq.f32.partialorder %v282, %v284
      %v286 = vsel %vm285, %v281, inf
      %287 = vmin.xlane.f32.xlu0 %v286
      %v288 = vpop.xlane.xlu0 %287
      %v289 = vcvt.f32.s32 %v288
      %v290 = vcvt.f32.s32 %v284
      %v291 = vshll.u32 %v290, 16
      %v292 = vadd.s32 %v291, %v289
      %vm293 = vcmp.eq.s32.totalorder %v278, %v292
      %v294 = vsel %vm293, 128, %v278
      %v295 = vand.u32 %v294, 65535
      %v296 = vshra.s32 %v294, 16
      %v297 = vcvt.s32.f32 %v295
      %v298 = vcvt.s32.f32 %v296
      %299 = vmin.xlane.f32.xlu0 %v298
      %v300 = vpop.xlane.xlu0 %299
      %vm301 = vcmp.eq.f32.partialorder %v298, %v300
      %v302 = vsel %vm301, %v297, inf
      %303 = vmin.xlane.f32.xlu0 %v302
      %v304 = vpop.xlane.xlu0 %303
      %v305 = vcvt.f32.s32 %v304
      %v306 = vcvt.f32.s32 %v300
      %v307 = vshll.u32 %v306, 16
      %v308 = vadd.s32 %v307, %v305
      %vm309 = vcmp.eq.s32.totalorder %v294, %v308
      %v310 = vsel %vm309, 128, %v294
      %v311 = vand.u32 %v310, 65535
      %v312 = vshra.s32 %v310, 16
      %v313 = vcvt.s32.f32 %v311
      %v314 = vcvt.s32.f32 %v312
      %315 = vmin.xlane.f32.xlu0 %v314
      %v316 = vpop.xlane.xlu0 %315
      %vm317 = vcmp.eq.f32.partialorder %v314, %v316
      %v318 = vsel %vm317, %v313, inf
      %319 = vmin.xlane.f32.xlu0 %v318
      %v320 = vpop.xlane.xlu0 %319
      %v321 = vcvt.f32.s32 %v320
      %v322 = vcvt.f32.s32 %v316
      %v323 = vshll.u32 %v322, 16
      %v324 = vadd.s32 %v323, %v321
      %vm325 = vcmask 7168
      %v326 = vsel %vm325, %v84, %v100
      %vm327 = vcmask 15360
      %v328 = vsel %vm327, %v326, %v116
      %v329 = vsel %vm26, %v328, %v132
      %vm330 = vcmask 31744
      %v331 = vsel %vm330, %v329, %v148
      %vm332 = vcmask 39936
      %v333 = vsel %vm332, %v331, %v164
      %vm334 = vcmask 48128
      %v335 = vsel %vm334, %v333, %v180
      %vm336 = vcmask 56320
      %v337 = vsel %vm336, %v335, %v196
      %vm338 = vcmask 64512
      %v339 = vsel %vm338, %v337, %v212
      %vm340 = vcmask 72704
      %v341 = vsel %vm340, %v339, %v228
      %vm342 = vcmask 80896
      %v343 = vsel %vm342, %v341, %v244
      %vm344 = vcmask 89088
      %v345 = vsel %vm344, %v343, %v260
      %vm346 = vcmask 97280
      %v347 = vsel %vm346, %v345, %v276
      %vm348 = vcmask 105472
      %v349 = vsel %vm348, %v347, %v292
      %vm350 = vcmask 113664
      %v351 = vsel %vm350, %v349, %v308
      %vm352 = vcmask 121856
      %v353 = vsel %vm352, %v351, %v324
      %vm354 = vcmp.eq.s32.totalorder %v353, 128
      %v355 = vsel %vm354, %v84, %v353
      %s356 = scalar_lea.vmem [#allocation2], %s20
      %vm357 = vcmask 130048
      %358 = vst.msk [vmem:[%s356] sm:$0xff] %vm357, %v355
    $region14: #{tpu_custom_call.1} parent=1 // loop_footer
      %s19 = sadd.s32 1, %s15
    $region15: #{tpu_custom_call.1} parent=1 // loop_footer_branch
      %14 = sbr.rel target = $region11
    $region16: #{tpu_custom_call.1} parent=1 // loop_exit
      _
    // Predicated region
    $region17: #{tpu_custom_call.1} parent=1 // pred_check
      _
    $region18: #{tpu_custom_call.1} parent=1 // pred_check_branch
      %360 = sbr.rel (0) target = $region20
    $region19: #{tpu_custom_call.1} parent=1 // pred_region
      %362 = vsyncadd [#allocation3], 0
      %s363 = sshll.u32 [#allocation2], 4
      %s364 = int_to_ptr.vmem [resolvable:$true] %s363
      %s365 = sshll.u32 %s2, 4
      %s366 = int_to_ptr.hbm [resolvable:$true] %s365
      %371 = dma.vmem_to_hbm [thread:$0]  %s364, 512, %s366, [#allocation3], 128, 128, 8
    $region20: #{tpu_custom_call.1} parent=1 // pred_fallthru
      _
    // Predicated region
    $region21: #{tpu_custom_call.1} parent=1 // pred_check
      _
    $region22: #{tpu_custom_call.1} parent=1 // pred_check_branch
      %373 = sbr.rel (0) target = $region24
    $region23: #{tpu_custom_call.1} parent=1 // pred_region
      %375 = dma.done [#allocation3], 512
    $region24: #{tpu_custom_call.1} parent=1 // pred_fallthru
      _
    %376 = vsyncpa [#allocation3], 1

</llo_original>
